<compile_context>
chip_gen: v6e
topology: v6e:2x2x1
jax: 0.10.0
libtpu: 0.0.40
codegen_flags: <defaults>
</compile_context>

<pallas_src>
import functools

import jax
import jax.numpy as jnp
import numpy as np
from jax.experimental import pallas as pl
from jax.experimental.pallas import tpu as pltpu

EPS = 1e-5  # nn.BatchNorm1d default eps


def _round_up(x, m):
    return (x + m - 1) // m * m


def _make_kernel(n_real: int, use_bf16_matmul: bool):
    inv_n = 1.0 / float(n_real)

    def kernel(x_ref, w1t_ref, gamma_ref, beta_ref, w2t_ref, b2_ref, o_ref):
        # x:      (Np, In_p)     zero-padded input
        # w1t:    (In_p, Hid_p)  pre-transposed, zero-padded Linear-1 weight
        # gamma/beta: (1, Hid_p) BN affine (zero-padded)
        # w2t:    (Hid_p, Out_p) pre-transposed, zero-padded Linear-2 weight
        # b2:     (1, Out_p)
        x = x_ref[...]
        w1t = w1t_ref[...]
        if use_bf16_matmul:
            x = x.astype(jnp.bfloat16)
            w1t = w1t.astype(jnp.bfloat16)

        # ---- Linear 1 (MXU, f32 accumulate). b1 intentionally omitted:
        # mean subtraction below cancels it exactly. ----
        h = jnp.dot(x, w1t, preferred_element_type=jnp.float32)  # (Np, Hid_p) f32

        # ---- BatchNorm1d (training mode, biased variance), stats in f32.
        # Padded rows of x are zero and there is no bias, so they contribute 0
        # to both sums; divide by the true batch size n_real. ----
        mean = jnp.sum(h, axis=0, keepdims=True) * inv_n          # (1, Hid_p)
        ex2 = jnp.sum(h * h, axis=0, keepdims=True) * inv_n
        var = ex2 - mean * mean
        inv_std = jax.lax.rsqrt(var + EPS)                        # EUP slot

        # Fold BN affine into one per-feature scale/shift row (computed once
        # on the (1, Hid_p) row, broadcast afterwards).
        scale = inv_std * gamma_ref[...]
        shift = beta_ref[...] - mean * scale

        # ---- normalize + affine + ReLU: 1 mul + 1 add + 1 max per element ----
        h_act = jnp.maximum(h * scale + shift, 0.0)

        # ---- Linear 2 (MXU) ----
        w2t = w2t_ref[...]
        if use_bf16_matmul:
            h_act = h_act.astype(jnp.bfloat16)
            w2t = w2t.astype(jnp.bfloat16)
        out = jnp.dot(h_act, w2t, preferred_element_type=jnp.float32) + b2_ref[...]
        o_ref[...] = out.astype(o_ref.dtype)

    return kernel


@functools.partial(jax.jit, static_argnames=("use_bf16_matmul",))
def discriminator_forward(x, w1, b1, gamma, beta, w2, b2, *, use_bf16_matmul=False):
    """x: (N, input_dim); w1: (hidden, input_dim); w2: (out_dim, hidden).

    b1 is accepted for API parity with the PyTorch module but is mathematically
    dead under train-mode BatchNorm (mean-subtracted away), so it is not used.
    """
    n, input_dim = x.shape
    hidden = w1.shape[0]
    out_dim = w2.shape[0]
    del b1  # cancelled exactly by BN mean subtraction

    n_p = _round_up(n, 8)             # sublane-aligned batch
    in_p = _round_up(input_dim, 128)  # lane-aligned features
    hid_p = _round_up(hidden, 128)
    out_p = _round_up(out_dim, 128)   # lane-dense output -> unmasked stores

    def pad2(a, rows, cols):
        return jnp.pad(a, ((0, rows - a.shape[0]), (0, cols - a.shape[1])))

    x_p = pad2(x, n_p, in_p)
    w1t_p = pad2(w1.T, in_p, hid_p)
    gamma_p = pad2(gamma.reshape(1, -1), 1, hid_p)
    beta_p = pad2(beta.reshape(1, -1), 1, hid_p)
    w2t_p = pad2(w2.T, hid_p, out_p)
    b2_p = pad2(b2.reshape(1, -1), 1, out_p)

    vmem = pl.BlockSpec(memory_space=pltpu.MemorySpace.VMEM)
    # TODO(synk): for large batches, add a batch grid (weights resident via
    # constant index_maps, dimension_semantics=("parallel",) for v7x megacore)
    # and switch BN to a two-pass sum/sum-sq accumulation so statistics still
    # cover the full batch; also budget VMEM explicitly for v7x's 64 MiB.
    out_padded = pl.pallas_call(
        _make_kernel(n, use_bf16_matmul),
        out_shape=jax.ShapeDtypeStruct((n_p, out_p), x.dtype),
        in_specs=[vmem] * 6,
        out_specs=vmem,
    )(x_p, w1t_p, gamma_p, beta_p, w2t_p, b2_p)
    return out_padded[:n, :out_dim]


def reference_forward(x, w1, b1, gamma, beta, w2, b2):
    h = x @ w1.T + b1
    mean = jnp.mean(h, axis=0, keepdims=True)
    var = jnp.mean((h - mean) ** 2, axis=0, keepdims=True)
    h = (h - mean) / jnp.sqrt(var + EPS) * gamma + beta
    h = jnp.maximum(h, 0.0)
    return h @ w2.T + b2


if __name__ == "__main__":
    # Small shapes consistent with the module: batch=8, input_dim=16, hidden=32, out=8
    N, INPUT_DIM, HIDDEN_DIM, OUT_DIM = 8, 16, 32, 8

    key = jax.random.PRNGKey(0)
    k_x, k_w1, k_b1, k_w2, k_b2 = jax.random.split(key, 5)

    x = jax.random.normal(k_x, (N, INPUT_DIM), dtype=jnp.float32)

    # Deterministic parameter init (PyTorch-style uniform fan-in bounds).
    bound1 = 1.0 / np.sqrt(INPUT_DIM)
    w1 = jax.random.uniform(k_w1, (HIDDEN_DIM, INPUT_DIM), jnp.float32, -bound1, bound1)
    b1 = jax.random.uniform(k_b1, (HIDDEN_DIM,), jnp.float32, -bound1, bound1)
    gamma = jnp.ones((HIDDEN_DIM,), jnp.float32)   # BatchNorm1d weight init
    beta = jnp.zeros((HIDDEN_DIM,), jnp.float32)   # BatchNorm1d bias init
    bound2 = 1.0 / np.sqrt(HIDDEN_DIM)
    w2 = jax.random.uniform(k_w2, (OUT_DIM, HIDDEN_DIM), jnp.float32, -bound2, bound2)
    b2 = jax.random.uniform(k_b2, (OUT_DIM,), jnp.float32, -bound2, bound2)

    ref = reference_forward(x, w1, b1, gamma, beta, w2, b2)

    # f32 MXU path: tight check (note the reference keeps b1 — it cancels
    # inside train-mode BN, verifying that dropping it in the kernel is exact).
    out_f32 = jax.block_until_ready(
        discriminator_forward(x, w1, b1, gamma, beta, w2, b2, use_bf16_matmul=False))
    np.testing.assert_allclose(np.asarray(out_f32), np.asarray(ref), rtol=1e-4, atol=1e-4)

    # bf16-at-the-MXU fast path (v6e/v7x): loose check, BN stats stay in f32.
    out_bf16 = jax.block_until_ready(
        discriminator_forward(x, w1, b1, gamma, beta, w2, b2, use_bf16_matmul=True))
    np.testing.assert_allclose(np.asarray(out_bf16), np.asarray(ref), rtol=0.1, atol=0.1)

    print("KERNEL_OK")
</pallas_src>

<mosaic_0001>
module attributes {stable_mosaic.version = 11 : i64} {
  func.func @kernel(%arg0: memref<8x128xf32, #tpu.memory_space<vmem>>, %arg1: memref<128x128xf32, #tpu.memory_space<vmem>>, %arg2: memref<1x128xf32, #tpu.memory_space<vmem>>, %arg3: memref<1x128xf32, #tpu.memory_space<vmem>>, %arg4: memref<128x128xf32, #tpu.memory_space<vmem>>, %arg5: memref<1x128xf32, #tpu.memory_space<vmem>>, %arg6: memref<8x128xf32, #tpu.memory_space<vmem>>) attributes {dimension_semantics = [], scalar_prefetch = 0 : i64, scratch_operands = 0 : i64, tpu.core_type = #tpu.core_type<tc>} {
    %c0 = arith.constant 0 : index
    %c0_0 = arith.constant 0 : index
    %0 = vector.load %arg0[%c0, %c0_0] : memref<8x128xf32, #tpu.memory_space<vmem>>, vector<8x128xf32>
    %c0_1 = arith.constant 0 : index
    %c0_2 = arith.constant 0 : index
    %1 = vector.load %arg1[%c0_1, %c0_2] : memref<128x128xf32, #tpu.memory_space<vmem>>, vector<128x128xf32>
    %cst = arith.constant dense<0.000000e+00> : vector<8x128xf32>
    %2 = tpu.matmul %0, %1, %cst {dimension_numbers = #tpu.dot_dimension_numbers<[1], [0], [0], [1], [0, 0, 1, 1], [], []>} : vector<8x128xf32>, vector<128x128xf32>, vector<8x128xf32> -> vector<8x128xf32>
    %cst_3 = arith.constant dense<0.000000e+00> : vector<128xf32>
    %3 = vector.multi_reduction <add>, %2, %cst_3 [0] : vector<8x128xf32> to vector<128xf32>
    %4 = vector.shape_cast %3 : vector<128xf32> to vector<1x128xf32>
    %cst_4 = arith.constant 1.250000e-01 : f32
    %5 = vector.broadcast %cst_4 : f32 to vector<1x128xf32>
    %6 = arith.mulf %4, %5 : vector<1x128xf32>
    %7 = arith.mulf %2, %2 : vector<8x128xf32>
    %cst_5 = arith.constant dense<0.000000e+00> : vector<128xf32>
    %8 = vector.multi_reduction <add>, %7, %cst_5 [0] : vector<8x128xf32> to vector<128xf32>
    %9 = vector.shape_cast %8 : vector<128xf32> to vector<1x128xf32>
    %cst_6 = arith.constant 1.250000e-01 : f32
    %10 = vector.broadcast %cst_6 : f32 to vector<1x128xf32>
    %11 = arith.mulf %9, %10 : vector<1x128xf32>
    %12 = arith.mulf %6, %6 : vector<1x128xf32>
    %13 = arith.subf %11, %12 : vector<1x128xf32>
    %cst_7 = arith.constant 9.99999974E-6 : f32
    %14 = vector.broadcast %cst_7 : f32 to vector<1x128xf32>
    %15 = arith.addf %13, %14 : vector<1x128xf32>
    %16 = math.rsqrt %15 : vector<1x128xf32>
    %c0_8 = arith.constant 0 : index
    %c0_9 = arith.constant 0 : index
    %17 = vector.load %arg2[%c0_8, %c0_9] : memref<1x128xf32, #tpu.memory_space<vmem>>, vector<1x128xf32>
    %18 = arith.mulf %16, %17 : vector<1x128xf32>
    %c0_10 = arith.constant 0 : index
    %c0_11 = arith.constant 0 : index
    %19 = vector.load %arg3[%c0_10, %c0_11] : memref<1x128xf32, #tpu.memory_space<vmem>>, vector<1x128xf32>
    %20 = arith.mulf %6, %18 : vector<1x128xf32>
    %21 = arith.subf %19, %20 : vector<1x128xf32>
    %22 = vector.broadcast %18 : vector<1x128xf32> to vector<8x128xf32>
    %23 = arith.mulf %2, %22 : vector<8x128xf32>
    %24 = vector.broadcast %21 : vector<1x128xf32> to vector<8x128xf32>
    %25 = arith.addf %23, %24 : vector<8x128xf32>
    %cst_12 = arith.constant 0.000000e+00 : f32
    %26 = vector.broadcast %cst_12 : f32 to vector<8x128xf32>
    %27 = arith.maximumf %25, %26 : vector<8x128xf32>
    %c0_13 = arith.constant 0 : index
    %c0_14 = arith.constant 0 : index
    %28 = vector.load %arg4[%c0_13, %c0_14] : memref<128x128xf32, #tpu.memory_space<vmem>>, vector<128x128xf32>
    %cst_15 = arith.constant dense<0.000000e+00> : vector<8x128xf32>
    %29 = tpu.matmul %27, %28, %cst_15 {dimension_numbers = #tpu.dot_dimension_numbers<[1], [0], [0], [1], [0, 0, 1, 1], [], []>} : vector<8x128xf32>, vector<128x128xf32>, vector<8x128xf32> -> vector<8x128xf32>
    %c0_16 = arith.constant 0 : index
    %c0_17 = arith.constant 0 : index
    %30 = vector.load %arg5[%c0_16, %c0_17] : memref<1x128xf32, #tpu.memory_space<vmem>>, vector<1x128xf32>
    %31 = vector.broadcast %30 : vector<1x128xf32> to vector<8x128xf32>
    %32 = arith.addf %29, %31 : vector<8x128xf32>
    %c0_18 = arith.constant 0 : index
    %c0_19 = arith.constant 0 : index
    %33 = vector.load %arg6[%c0_18, %c0_19] : memref<8x128xf32, #tpu.memory_space<vmem>>, vector<8x128xf32>
    tpu.vector_store %arg6[%c0_18, %c0_19], %32 {strides = array<i32>} : memref<8x128xf32, #tpu.memory_space<vmem>>, vector<8x128xf32>,
    return
  }
}

</mosaic_0001>

<llo_original>
// kernel: discriminator_forward.1
$region0: #{discriminator_forward.1}
  #allocation0 [shape = 'u32[]', space=smem, size = 0x4, offset = 0x4, fixed_abs, tag = 'smem constant byte address 0x4 - core index']
  #allocation1 [shape = 'u32[144,128]{1,0:T(1,128)}', space=vmem, size = 0x12000, scoped, tag = 'internal scratch']
  %s0 = inlined_call_operand.vmem [shape: f32[8,128], index: 0, kind: input, shape index: {}]
  %s1 = inlined_call_operand.vmem [shape: f32[128,128], index: 1, kind: input, shape index: {}]
  %s2 = inlined_call_operand.vmem [shape: f32[1,128], index: 2, kind: input, shape index: {}]
  %s3 = inlined_call_operand.vmem [shape: f32[1,128], index: 3, kind: input, shape index: {}]
  %s4 = inlined_call_operand.vmem [shape: f32[128,128], index: 4, kind: input, shape index: {}]
  %s5 = inlined_call_operand.vmem [shape: f32[1,128], index: 5, kind: input, shape index: {}]
  %s6 = inlined_call_operand.hbm [shape: f32[8,128], index: 6, kind: output, shape index: {}]
  %s7 = sld [smem:[#allocation0]]
  $region34: #{discriminator_forward.1} parent=0
    _
  %s9 = ssub.s32 1, %s7
  %s10 = scalar_select 0, %s9, %s7
  $region1: #{discriminator_forward.1} parent=0
    #allocation2 [shape = 'u8[4096]{0}', space=vmem, size = 0x1000, scoped, tag = 'output window, operand 0, single buffered']
    #allocation3 [shape = 's32[1]{0}', space=sflag, size = 0x4, scoped, tag = 'scoped memory for discriminator_forward.1']
    %11 = vsyncpa [#allocation3], 0
    // Predicated region
    $region2: #{discriminator_forward.1} parent=1 // pred_check
      _
    $region3: #{discriminator_forward.1} parent=1 // pred_check_branch
      %13 = sbr.rel (0) target = $region5
    $region4: #{discriminator_forward.1} parent=1 // pred_region
      _
    $region5: #{discriminator_forward.1} parent=1 // pred_fallthru
      _
    // Predicated region
    $region6: #{discriminator_forward.1} parent=1 // pred_check
      _
    $region7: #{discriminator_forward.1} parent=1 // pred_check_branch
      %15 = sbr.rel (0) target = $region9
    $region8: #{discriminator_forward.1} parent=1 // pred_region
      _
    $region9: #{discriminator_forward.1} parent=1 // pred_fallthru
      _
    // Predicated region
    $region10: #{discriminator_forward.1} parent=1 // pred_check
      _
    $region11: #{discriminator_forward.1} parent=1 // pred_check_branch
      %17 = sbr.rel (0) target = $region13
    $region12: #{discriminator_forward.1} parent=1 // pred_region
      _
    $region13: #{discriminator_forward.1} parent=1 // pred_fallthru
      _
    // Predicated region
    $region14: #{discriminator_forward.1} parent=1 // pred_check
      _
    $region15: #{discriminator_forward.1} parent=1 // pred_check_branch
      %19 = sbr.rel (0) target = $region17
    $region16: #{discriminator_forward.1} parent=1 // pred_region
      _
    $region17: #{discriminator_forward.1} parent=1 // pred_fallthru
      _
    // Predicated region
    $region18: #{discriminator_forward.1} parent=1 // pred_check
      _
    $region19: #{discriminator_forward.1} parent=1 // pred_check_branch
      %21 = sbr.rel (0) target = $region21
    $region20: #{discriminator_forward.1} parent=1 // pred_region
      _
    $region21: #{discriminator_forward.1} parent=1 // pred_fallthru
      _
    // Predicated region
    $region22: #{discriminator_forward.1} parent=1 // pred_check
      _
    $region23: #{discriminator_forward.1} parent=1 // pred_check_branch
      %23 = sbr.rel (0) target = $region25
    $region24: #{discriminator_forward.1} parent=1 // pred_region
      _
    $region25: #{discriminator_forward.1} parent=1 // pred_fallthru
      _
    %v24 = vld [vmem:[%s0] sm:$0xff]
    %v25 = vld [vmem:[%s1] sm:$0xff]
    %v26 = vld [vmem:[%s1 + $0x8] sm:$0xff]
    %v27 = vld [vmem:[%s1 + $0x10] sm:$0xff]
    %v28 = vld [vmem:[%s1 + $0x18] sm:$0xff]
    %v29 = vld [vmem:[%s1 + $0x20] sm:$0xff]
    %v30 = vld [vmem:[%s1 + $0x28] sm:$0xff]
    %v31 = vld [vmem:[%s1 + $0x30] sm:$0xff]
    %v32 = vld [vmem:[%s1 + $0x38] sm:$0xff]
    %v33 = vld [vmem:[%s1 + $0x40] sm:$0xff]
    %v34 = vld [vmem:[%s1 + $0x48] sm:$0xff]
    %v35 = vld [vmem:[%s1 + $0x50] sm:$0xff]
    %v36 = vld [vmem:[%s1 + $0x58] sm:$0xff]
    %v37 = vld [vmem:[%s1 + $0x60] sm:$0xff]
    %v38 = vld [vmem:[%s1 + $0x68] sm:$0xff]
    %v39 = vld [vmem:[%s1 + $0x70] sm:$0xff]
    %v40 = vld [vmem:[%s1 + $0x78] sm:$0xff]
    %41 = vmatprep.subr.mxu0 0.0
    %42 = vmatpush1.msra.mxu0 %v40
    %43 = vmatprep.subr.mxu0 0.0
    %44 = vmatpush1.msra.mxu0 %v39
    %45 = vmatprep.subr.mxu0 0.0
    %46 = vmatpush1.msra.mxu0 %v38
    %47 = vmatprep.subr.mxu0 0.0
    %48 = vmatpush1.msra.mxu0 %v37
    %49 = vmatprep.subr.mxu0 0.0
    %50 = vmatpush1.msra.mxu0 %v36
    %51 = vmatprep.subr.mxu0 0.0
    %52 = vmatpush1.msra.mxu0 %v35
    %53 = vmatprep.subr.mxu0 0.0
    %54 = vmatpush1.msra.mxu0 %v34
    %55 = vmatprep.subr.mxu0 0.0
    %56 = vmatpush1.msra.mxu0 %v33
    %57 = vmatprep.subr.mxu0 0.0
    %58 = vmatpush1.msra.mxu0 %v32
    %59 = vmatprep.subr.mxu0 0.0
    %60 = vmatpush1.msra.mxu0 %v31
    %61 = vmatprep.subr.mxu0 0.0
    %62 = vmatpush1.msra.mxu0 %v30
    %63 = vmatprep.subr.mxu0 0.0
    %64 = vmatpush1.msra.mxu0 %v29
    %65 = vmatprep.subr.mxu0 0.0
    %66 = vmatpush1.msra.mxu0 %v28
    %67 = vmatprep.subr.mxu0 0.0
    %68 = vmatpush1.msra.mxu0 %v27
    %69 = vmatprep.subr.mxu0 0.0
    %70 = vmatpush1.msra.mxu0 %v26
    %71 = vmatprep.subr.mxu0 0.0
    %72 = vmatpush1.msra.mxu0 %v25
    %73 = vmatprep.subr.mxu0 0.0
    %74 = vmatpush2.msra.mxu0 0.0
    %75 = vmatprep.subr.mxu0 0.0
    %76 = vmatpush2.msra.mxu0 0.0
    %77 = vmatprep.subr.mxu0 0.0
    %78 = vmatpush2.msra.mxu0 0.0
    %79 = vmatprep.subr.mxu0 0.0
    %80 = vmatpush2.msra.mxu0 0.0
    %81 = vmatprep.subr.mxu0 0.0
    %82 = vmatpush2.msra.mxu0 0.0
    %83 = vmatprep.subr.mxu0 0.0
    %84 = vmatpush2.msra.mxu0 0.0
    %85 = vmatprep.subr.mxu0 0.0
    %86 = vmatpush2.msra.mxu0 0.0
    %87 = vmatprep.subr.mxu0 0.0
    %88 = vmatpush2.msra.mxu0 0.0
    %89 = vmatprep.subr.mxu0 0.0
    %90 = vmatpush2.msra.mxu0 0.0
    %91 = vmatprep.subr.mxu0 0.0
    %92 = vmatpush2.msra.mxu0 0.0
    %93 = vmatprep.subr.mxu0 0.0
    %94 = vmatpush2.msra.mxu0 0.0
    %95 = vmatprep.subr.mxu0 0.0
    %96 = vmatpush2.msra.mxu0 0.0
    %97 = vmatprep.subr.mxu0 0.0
    %98 = vmatpush2.msra.mxu0 0.0
    %99 = vmatprep.subr.mxu0 0.0
    %100 = vmatpush2.msra.mxu0 0.0
    %101 = vmatprep.subr.mxu0 0.0
    %102 = vmatpush2.msra.mxu0 0.0
    %103 = vmatprep.subr.mxu0 0.0
    %104 = vmatpush2.msra.mxu0 0.0
    %105 = vmatprep.mubr.f32.mxu0 0.0
    %106 = vmatmul.mubr.f32.gmra.mxu0 %v24
    %v107 = vpop.f32.mrf.mxu0
    %v108 = vadd.f32 0.0, %v107
    %v109 = vpop.f32.mrf.mxu0
    %110 = vdwg.mxu0
    %v111 = vrot.slane %v108, 4
    %v112 = vadd.f32 %v108, %v111
    %v113 = vrot.slane %v112, 2
    %v114 = vadd.f32 %v112, %v113
    %v115 = vrot.slane %v114, 1
    %v116 = vadd.f32 %v114, %v115
    %v117 = vmul.f32 %v116, 0.125
    %v118 = vmul.f32 %v108, %v108
    %v119 = vrot.slane %v118, 4
    %v120 = vadd.f32 %v118, %v119
    %v121 = vrot.slane %v120, 2
    %v122 = vadd.f32 %v120, %v121
    %v123 = vrot.slane %v122, 1
    %v124 = vadd.f32 %v122, %v123
    %v125 = vmul.f32 %v124, 0.125
    %v126 = vmul.f32 %v117, %v117
    %v127 = vsub.f32 %v125, %v126
    %v128 = vadd.f32 %v127, 1e-05
    %v129 = vrsqrt.pop %v128
    %v130 = vld [vmem:[%s2] sm:$0x1]
    %v131 = vmul.f32 %v129, %v130
    %v132 = vld [vmem:[%s3] sm:$0x1]
    %v133 = vmul.f32 %v117, %v131
    %v134 = vsub.f32 %v132, %v133
    %v135 = vlaneseq
    %v136 = vshrl.u32 %v135, 7
    %v137 = vsub.s32 0, %v136
    %v138 = vrot.slane %v131, %v137
    %v139 = vmul.f32 %v108, %v138
    %v141 = vlaneseq
    %v142 = vshrl.u32 %v141, 7
    %v143 = vsub.s32 0, %v142
    %v144 = vrot.slane %v134, %v143
    %v146 = vadd.f32 %v139, %v144
    %v147 = vmax.f32 %v146, 0.0
    %v148 = vld [vmem:[%s4] sm:$0xff]
    %v149 = vld [vmem:[%s4 + $0x8] sm:$0xff]
    %v150 = vld [vmem:[%s4 + $0x10] sm:$0xff]
    %v151 = vld [vmem:[%s4 + $0x18] sm:$0xff]
    %v152 = vld [vmem:[%s4 + $0x20] sm:$0xff]
    %v153 = vld [vmem:[%s4 + $0x28] sm:$0xff]
    %v154 = vld [vmem:[%s4 + $0x30] sm:$0xff]
    %v155 = vld [vmem:[%s4 + $0x38] sm:$0xff]
    %v156 = vld [vmem:[%s4 + $0x40] sm:$0xff]
    %v157 = vld [vmem:[%s4 + $0x48] sm:$0xff]
    %v158 = vld [vmem:[%s4 + $0x50] sm:$0xff]
    %v159 = vld [vmem:[%s4 + $0x58] sm:$0xff]
    %v160 = vld [vmem:[%s4 + $0x60] sm:$0xff]
    %v161 = vld [vmem:[%s4 + $0x68] sm:$0xff]
    %v162 = vld [vmem:[%s4 + $0x70] sm:$0xff]
    %v163 = vld [vmem:[%s4 + $0x78] sm:$0xff]
    %v164 = vld [vmem:[%s5] sm:$0x1]
    %v166 = vlaneseq
    %v167 = vshrl.u32 %v166, 7
    %v168 = vsub.s32 0, %v167
    %v169 = vrot.slane %v164, %v168
    %171 = vmatprep.subr.mxu0 0.0
    %172 = vmatpush1.msra.mxu0 %v163
    %173 = vmatprep.subr.mxu0 0.0
    %174 = vmatpush1.msra.mxu0 %v162
    %175 = vmatprep.subr.mxu0 0.0
    %176 = vmatpush1.msra.mxu0 %v161
    %177 = vmatprep.subr.mxu0 0.0
    %178 = vmatpush1.msra.mxu0 %v160
    %179 = vmatprep.subr.mxu0 0.0
    %180 = vmatpush1.msra.mxu0 %v159
    %181 = vmatprep.subr.mxu0 0.0
    %182 = vmatpush1.msra.mxu0 %v158
    %183 = vmatprep.subr.mxu0 0.0
    %184 = vmatpush1.msra.mxu0 %v157
    %185 = vmatprep.subr.mxu0 0.0
    %186 = vmatpush1.msra.mxu0 %v156
    %187 = vmatprep.subr.mxu0 0.0
    %188 = vmatpush1.msra.mxu0 %v155
    %189 = vmatprep.subr.mxu0 0.0
    %190 = vmatpush1.msra.mxu0 %v154
    %191 = vmatprep.subr.mxu0 0.0
    %192 = vmatpush1.msra.mxu0 %v153
    %193 = vmatprep.subr.mxu0 0.0
    %194 = vmatpush1.msra.mxu0 %v152
    %195 = vmatprep.subr.mxu0 0.0
    %196 = vmatpush1.msra.mxu0 %v151
    %197 = vmatprep.subr.mxu0 0.0
    %198 = vmatpush1.msra.mxu0 %v150
    %199 = vmatprep.subr.mxu0 0.0
    %200 = vmatpush1.msra.mxu0 %v149
    %201 = vmatprep.subr.mxu0 0.0
    %202 = vmatpush1.msra.mxu0 %v148
    %203 = vmatprep.subr.mxu0 0.0
    %204 = vmatpush2.msra.mxu0 0.0
    %205 = vmatprep.subr.mxu0 0.0
    %206 = vmatpush2.msra.mxu0 0.0
    %207 = vmatprep.subr.mxu0 0.0
    %208 = vmatpush2.msra.mxu0 0.0
    %209 = vmatprep.subr.mxu0 0.0
    %210 = vmatpush2.msra.mxu0 0.0
    %211 = vmatprep.subr.mxu0 0.0
    %212 = vmatpush2.msra.mxu0 0.0
    %213 = vmatprep.subr.mxu0 0.0
    %214 = vmatpush2.msra.mxu0 0.0
    %215 = vmatprep.subr.mxu0 0.0
    %216 = vmatpush2.msra.mxu0 0.0
    %217 = vmatprep.subr.mxu0 0.0
    %218 = vmatpush2.msra.mxu0 0.0
    %219 = vmatprep.subr.mxu0 0.0
    %220 = vmatpush2.msra.mxu0 0.0
    %221 = vmatprep.subr.mxu0 0.0
    %222 = vmatpush2.msra.mxu0 0.0
    %223 = vmatprep.subr.mxu0 0.0
    %224 = vmatpush2.msra.mxu0 0.0
    %225 = vmatprep.subr.mxu0 0.0
    %226 = vmatpush2.msra.mxu0 0.0
    %227 = vmatprep.subr.mxu0 0.0
    %228 = vmatpush2.msra.mxu0 0.0
    %229 = vmatprep.subr.mxu0 0.0
    %230 = vmatpush2.msra.mxu0 0.0
    %231 = vmatprep.subr.mxu0 0.0
    %232 = vmatpush2.msra.mxu0 0.0
    %233 = vmatprep.subr.mxu0 0.0
    %234 = vmatpush2.msra.mxu0 0.0
    %235 = vmatprep.mubr.f32.mxu0 0.0
    %236 = vmatmul.mubr.f32.gmra.mxu0 %v147
    %v237 = vpop.f32.mrf.mxu0
    %v238 = vadd.f32 %v169, %v237
    %v239 = vpop.f32.mrf.mxu0
    %240 = vdwg.mxu0
    %241 = vst [vmem:[#allocation2] sm:$0xff] %v238
    // Predicated region
    $region26: #{discriminator_forward.1} parent=1 // pred_check
      _
    $region27: #{discriminator_forward.1} parent=1 // pred_check_branch
      %243 = sbr.rel (0) target = $region29
    $region28: #{discriminator_forward.1} parent=1 // pred_region
      %s245 = ssub.s32 128, 128
      %246 = vsyncadd [#allocation3], %s245
      %s248 = sshll.u32 [#allocation2], 4
      %s249 = int_to_ptr.vmem [resolvable:$true] %s248
      %251 = dma.vmem_to_hbm [thread:$0]  %s249, 128, %s6, [#allocation3]
    $region29: #{discriminator_forward.1} parent=1 // pred_fallthru
      _
    // Predicated region
    $region30: #{discriminator_forward.1} parent=1 // pred_check
      _
    $region31: #{discriminator_forward.1} parent=1 // pred_check_branch
      %253 = sbr.rel (0) target = $region33
    $region32: #{discriminator_forward.1} parent=1 // pred_region
      %254 = dma.done [#allocation3], 128
    $region33: #{discriminator_forward.1} parent=1 // pred_fallthru
      _
    %255 = vsyncpa [#allocation3], 1

</llo_original>
